<compile_context>
chip_gen: v5e
topology: v5e:2x2
jax: 0.10.0
libtpu: 0.0.40
codegen_flags: <defaults>
</compile_context>

<pallas_src>
import functools

import jax
import jax.numpy as jnp
import numpy as np
from jax import lax
from jax.experimental import pallas as pl
from jax.experimental.pallas import tpu as pltpu

EPS = 1e-5  # torch.nn.InstanceNorm2d default eps


def _genblock_kernel(x_ref, w_ref, cmod_ref, o_ref, *, H, W, nb):
    # x_ref:    (nb, Cin, Lf)   H-reflect-padded image, row-major flattened and
    #                           zero-padded by one element front/back,
    #                           Lf = (H+2)*W + 2.
    # w_ref:    (9, Cout, Cin)  per-tap weights, tap index t = kh*3 + kw.
    # cmod_ref: (1, H*W)        int32 column index within each row (q mod W).
    # o_ref:    (nb, Cout, H*W) output, H*W on the 128-lane axis (NCHW-flat).
    HW = H * W
    inv_hw = 1.0 / HW

    # Boundary-column masks for the W-reflection, hoisted out of all loops
    # (JAX does not CSE broadcasts).
    cmod = cmod_ref[...]
    left_edge = cmod == 0            # (1, HW)
    right_edge = cmod == (W - 1)     # (1, HW)

    def process_sample(n):
        x_n = x_ref[n]               # (Cin, Lf), bf16 or f32
        acc = None
        for kh in range(3):          # static unroll over the 9 taps
            base = 1 + kh * W        # +1 for the leading zero-pad element
            # Three lane-shifted views of padded rows kh .. kh+H-1.
            s_m1 = x_n[:, base - 1: base - 1 + HW]   # column j-1 (interior)
            s_0 = x_n[:, base: base + HW]            # column j
            s_p1 = x_n[:, base + 1: base + 1 + HW]   # column j+1 (interior)
            # Reflect fix-ups at the two boundary columns of every row.
            tap_kw0 = jnp.where(left_edge, s_p1, s_m1)
            tap_kw1 = s_0
            tap_kw2 = jnp.where(right_edge, s_m1, s_p1)
            for kw, tap in enumerate((tap_kw0, tap_kw1, tap_kw2)):
                part = jnp.dot(w_ref[kh * 3 + kw], tap,
                               preferred_element_type=jnp.float32)
                acc = part if acc is None else acc + part   # (Cout, HW) f32

        # InstanceNorm2d (affine=False, biased variance), two-pass, f32.
        mean = jnp.sum(acc, axis=1, keepdims=True) * inv_hw
        cen = acc - mean
        var = jnp.sum(cen * cen, axis=1, keepdims=True) * inv_hw
        y = cen * lax.rsqrt(var + EPS)

        # ReLU + lane-dense store (H*W on the lane axis, already NCHW order).
        o_ref[n] = jnp.maximum(y, 0.0).astype(o_ref.dtype)

    if nb == 1:
        process_sample(0)
    else:
        # fori_loop bounds live ranges (a static Python loop does not).
        def body(n, carry):
            process_sample(n)
            return carry
        lax.fori_loop(0, nb, body, 0)


def genblock_forward(x, weight, bias=None, *, kernel_size=3, padding=1,
                     samples_per_block=1, compute_dtype=jnp.bfloat16,
                     vmem_limit_bytes=64 * 1024 * 1024):
    """GenBlock forward. x: (N, Cin, H, W) NCHW; weight: (Cout, Cin, 3, 3).

    `bias` is accepted for API parity but ignored: a per-channel conv bias is
    exactly cancelled by the following InstanceNorm2d(affine=False).  This is
    only valid for affine=False with the norm immediately after the conv.
    """
    # TODO(synk): generalize in-kernel tap formation to other kernel_size /
    # stride (7x7 stem, stride-2 down/up blocks); this covers the 3x3/s1/p1
    # GenBlock configuration.
    assert kernel_size == 3 and padding == 1, "kernel supports k=3, p=1 only"
    del bias  # mathematically cancelled by InstanceNorm2d(affine=False)

    N, Cin, H, W = x.shape
    Cout = weight.shape[0]
    HW = H * W                      # ideally a multiple of 128 (lane-dense vst)
    Hp = H + 2
    Lf = Hp * W + 2
    nb = samples_per_block
    assert N % nb == 0, "samples_per_block must divide the batch"

    # Reflect-pad in H only (the W reflection is handled inside the kernel by
    # boundary-column selects), flatten spatially, and add one zero element on
    # each end so every tap's lane-shifted window stays in bounds.  This is
    # the ONLY wrapper-side pass over the activation (~1.1x raw size, vs the
    # previous 9x im2col slab).
    xh = jnp.pad(x, ((0, 0), (0, 0), (1, 1), (0, 0)), mode="reflect")
    xf = jnp.pad(xh.reshape(N, Cin, Hp * W), ((0, 0), (0, 0), (1, 1)))
    xf = xf.astype(compute_dtype)

    # (Cout, Cin, 3, 3) -> (3, 3, Cout, Cin) -> (9, Cout, Cin); tap t = kh*3+kw
    w_taps = jnp.transpose(weight, (2, 3, 0, 1)).reshape(9, Cout, Cin)
    w_taps = w_taps.astype(compute_dtype)

    # Column index (q mod W) of each flattened output pixel, for the
    # W-reflection boundary selects (built host-side; no in-kernel iota/mod).
    col_mod = (jnp.arange(HW, dtype=jnp.int32) % W).reshape(1, HW)

    kernel = functools.partial(_genblock_kernel, H=H, W=W, nb=nb)

    out = pl.pallas_call(
        kernel,
        out_shape=jax.ShapeDtypeStruct((N, Cout, HW), x.dtype),
        grid_spec=pltpu.PrefetchScalarGridSpec(
            num_scalar_prefetch=0,
            grid=(N // nb,),            # keep >= 2 steps so both v7x TCs work
            in_specs=[
                pl.BlockSpec((nb, Cin, Lf), lambda n: (n, 0, 0)),
                # Constant index maps: these blocks are fetched once and reused
                # across the whole grid.
                # TODO(synk): pipeline_mode=pl.Buffered(1) here if VMEM ever
                # gets tight at production sizes (the blocks never change).
                pl.BlockSpec((9, Cout, Cin), lambda n: (0, 0, 0)),
                pl.BlockSpec((1, HW), lambda n: (0, 0)),
            ],
            out_specs=pl.BlockSpec((nb, Cout, HW), lambda n: (n, 0, 0)),
        ),
        compiler_params=pltpu.CompilerParams(
            dimension_semantics=("parallel",),
            # Explicit scoped-VMEM budget (defaults: 16 MiB v5e / 32 MiB
            # v6e-v7x).  64 MiB leaves headroom on v5e/v6e (128 MiB physical)
            # and matches v7x's physical capacity; per-sample usage here is a
            # few MiB even at Cin=Cout=256, 64x64.
            vmem_limit_bytes=vmem_limit_bytes,
        ),
    )(xf, w_taps, col_mod)

    # (N, Cout, H*W) is contiguous NCHW already -> reshape is free.
    return out.reshape(N, Cout, H, W)


def genblock_ref(x, weight, bias, padding=1):
    """Pure-JAX reference (reflect-pad conv + bias + instance norm + relu)."""
    xp = jnp.pad(x, ((0, 0), (0, 0), (padding, padding), (padding, padding)),
                 mode="reflect")
    y = lax.conv_general_dilated(
        xp, weight, window_strides=(1, 1), padding="VALID",
        dimension_numbers=("NCHW", "OIHW", "NCHW"))
    y = y + bias[None, :, None, None]
    mean = jnp.mean(y, axis=(2, 3), keepdims=True)
    var = jnp.mean((y - mean) ** 2, axis=(2, 3), keepdims=True)
    y = (y - mean) * lax.rsqrt(var + EPS)
    return jnp.maximum(y, 0.0)


if __name__ == "__main__":
    # GenBlock(in_channels=4, out_channels=8, down=True, use_act=True,
    #          kernel_size=3, stride=1, padding=1)
    N, Cin, Cout, Hs, Ws, Kk = 2, 4, 8, 16, 16, 3

    key = jax.random.PRNGKey(0)
    kx, kw, kb = jax.random.split(key, 3)

    # Deterministic parameter init (Conv2d-style uniform fan-in bound).
    fan_in = Cin * Kk * Kk
    bound = 1.0 / np.sqrt(fan_in)
    weight = jax.random.uniform(kw, (Cout, Cin, Kk, Kk), jnp.float32,
                                minval=-bound, maxval=bound)
    bias = jax.random.uniform(kb, (Cout,), jnp.float32,
                              minval=-bound, maxval=bound)
    x = jax.random.normal(kx, (N, Cin, Hs, Ws), jnp.float32)

    y_ref = jax.block_until_ready(genblock_ref(x, weight, bias, padding=1))

    # f32 matmul path: matches the reference tightly.
    y_f32 = jax.block_until_ready(
        genblock_forward(x, weight, bias, compute_dtype=jnp.float32))
    np.testing.assert_allclose(np.asarray(y_f32), np.asarray(y_ref),
                               rtol=1e-4, atol=1e-4)

    # bf16 matmul path (production default: native MXU rate, half the HBM /
    # VMEM traffic); f32 accumulation + f32 norm keeps the error small.
    y_bf16 = jax.block_until_ready(
        genblock_forward(x, weight, bias, compute_dtype=jnp.bfloat16))
    np.testing.assert_allclose(np.asarray(y_bf16), np.asarray(y_ref),
                               rtol=5e-2, atol=5e-2)

    # Multi-sample block (exercises the in-kernel fori_loop path).
    y_nb2 = jax.block_until_ready(
        genblock_forward(x, weight, bias, samples_per_block=2,
                         compute_dtype=jnp.bfloat16))
    np.testing.assert_allclose(np.asarray(y_nb2), np.asarray(y_ref),
                               rtol=5e-2, atol=5e-2)

    print("KERNEL_OK")
</pallas_src>

<mosaic_0001>
module attributes {stable_mosaic.version = 11 : i64} {
  func.func @_genblock_kernel(%arg0: i32, %arg1: memref<1x4x290xf32, #tpu.memory_space<vmem>>, %arg2: memref<9x8x4xf32, #tpu.memory_space<vmem>>, %arg3: memref<1x256xi32, #tpu.memory_space<vmem>>, %arg4: memref<1x8x256xf32, #tpu.memory_space<vmem>>) attributes {dimension_semantics = [#tpu.dimension_semantics<parallel>], iteration_bounds = array<i64: 2>, scalar_prefetch = 0 : i64, scratch_operands = 0 : i64, tpu.core_type = #tpu.core_type<tc>, window_params = [{transform_indices = @transform_0, window_bounds = array<i64: 1, 4, 290>}, {pipeline_mode = #tpu.pipeline_mode<synchronous>, transform_indices = @transform_1, window_bounds = array<i64: 9, 8, 4>}, {pipeline_mode = #tpu.pipeline_mode<synchronous>, transform_indices = @transform_2, window_bounds = array<i64: 1, 256>}, {transform_indices = @transform_3, window_bounds = array<i64: 1, 8, 256>}]} {
    %c0 = arith.constant 0 : index
    %c0_0 = arith.constant 0 : index
    %0 = vector.load %arg3[%c0, %c0_0] : memref<1x256xi32, #tpu.memory_space<vmem>>, vector<1x256xi32>
    %c0_i32 = arith.constant 0 : i32
    %1 = vector.broadcast %c0_i32 : i32 to vector<1x256xi32>
    %2 = arith.cmpi eq, %0, %1 : vector<1x256xi32>
    %c15_i32 = arith.constant 15 : i32
    %3 = vector.broadcast %c15_i32 : i32 to vector<1x256xi32>
    %4 = arith.cmpi eq, %0, %3 : vector<1x256xi32>
    %c0_1 = arith.constant 0 : index
    %c0_2 = arith.constant 0 : index
    %c0_3 = arith.constant 0 : index
    %5 = vector.load %arg1[%c0_1, %c0_2, %c0_3] : memref<1x4x290xf32, #tpu.memory_space<vmem>>, vector<1x4x290xf32>
    %6 = vector.shape_cast %5 : vector<1x4x290xf32> to vector<4x290xf32>
    %7 = vector.extract_strided_slice %6 {offsets = [0, 0], sizes = [4, 256], strides = [1, 1]} : vector<4x290xf32> to vector<4x256xf32>
    %8 = vector.extract_strided_slice %6 {offsets = [0, 1], sizes = [4, 256], strides = [1, 1]} : vector<4x290xf32> to vector<4x256xf32>
    %9 = vector.extract_strided_slice %6 {offsets = [0, 2], sizes = [4, 256], strides = [1, 1]} : vector<4x290xf32> to vector<4x256xf32>
    %10 = vector.shape_cast %2 : vector<1x256xi1> to vector<1x256xi1>
    %11 = vector.broadcast %10 : vector<1x256xi1> to vector<4x256xi1>
    %12 = arith.select %11, %9, %7 : vector<4x256xi1>, vector<4x256xf32>
    %13 = vector.shape_cast %4 : vector<1x256xi1> to vector<1x256xi1>
    %14 = vector.broadcast %13 : vector<1x256xi1> to vector<4x256xi1>
    %15 = arith.select %14, %7, %9 : vector<4x256xi1>, vector<4x256xf32>
    %c0_4 = arith.constant 0 : index
    %c0_5 = arith.constant 0 : index
    %c0_6 = arith.constant 0 : index
    %16 = vector.load %arg2[%c0_4, %c0_5, %c0_6] : memref<9x8x4xf32, #tpu.memory_space<vmem>>, vector<1x8x4xf32>
    %17 = vector.shape_cast %16 : vector<1x8x4xf32> to vector<8x4xf32>
    %cst = arith.constant dense<0.000000e+00> : vector<8x256xf32>
    %18 = tpu.matmul %17, %12, %cst {dimension_numbers = #tpu.dot_dimension_numbers<[1], [0], [0], [1], [0, 0, 1, 1], [], []>} : vector<8x4xf32>, vector<4x256xf32>, vector<8x256xf32> -> vector<8x256xf32>
    %c1 = arith.constant 1 : index
    %c0_7 = arith.constant 0 : index
    %c0_8 = arith.constant 0 : index
    %19 = vector.load %arg2[%c1, %c0_7, %c0_8] : memref<9x8x4xf32, #tpu.memory_space<vmem>>, vector<1x8x4xf32>
    %20 = vector.shape_cast %19 : vector<1x8x4xf32> to vector<8x4xf32>
    %cst_9 = arith.constant dense<0.000000e+00> : vector<8x256xf32>
    %21 = tpu.matmul %20, %8, %cst_9 {dimension_numbers = #tpu.dot_dimension_numbers<[1], [0], [0], [1], [0, 0, 1, 1], [], []>} : vector<8x4xf32>, vector<4x256xf32>, vector<8x256xf32> -> vector<8x256xf32>
    %22 = arith.addf %18, %21 : vector<8x256xf32>
    %c2 = arith.constant 2 : index
    %c0_10 = arith.constant 0 : index
    %c0_11 = arith.constant 0 : index
    %23 = vector.load %arg2[%c2, %c0_10, %c0_11] : memref<9x8x4xf32, #tpu.memory_space<vmem>>, vector<1x8x4xf32>
    %24 = vector.shape_cast %23 : vector<1x8x4xf32> to vector<8x4xf32>
    %cst_12 = arith.constant dense<0.000000e+00> : vector<8x256xf32>
    %25 = tpu.matmul %24, %15, %cst_12 {dimension_numbers = #tpu.dot_dimension_numbers<[1], [0], [0], [1], [0, 0, 1, 1], [], []>} : vector<8x4xf32>, vector<4x256xf32>, vector<8x256xf32> -> vector<8x256xf32>
    %26 = arith.addf %22, %25 : vector<8x256xf32>
    %27 = vector.extract_strided_slice %6 {offsets = [0, 16], sizes = [4, 256], strides = [1, 1]} : vector<4x290xf32> to vector<4x256xf32>
    %28 = vector.extract_strided_slice %6 {offsets = [0, 17], sizes = [4, 256], strides = [1, 1]} : vector<4x290xf32> to vector<4x256xf32>
    %29 = vector.extract_strided_slice %6 {offsets = [0, 18], sizes = [4, 256], strides = [1, 1]} : vector<4x290xf32> to vector<4x256xf32>
    %30 = vector.shape_cast %2 : vector<1x256xi1> to vector<1x256xi1>
    %31 = vector.broadcast %30 : vector<1x256xi1> to vector<4x256xi1>
    %32 = arith.select %31, %29, %27 : vector<4x256xi1>, vector<4x256xf32>
    %33 = vector.shape_cast %4 : vector<1x256xi1> to vector<1x256xi1>
    %34 = vector.broadcast %33 : vector<1x256xi1> to vector<4x256xi1>
    %35 = arith.select %34, %27, %29 : vector<4x256xi1>, vector<4x256xf32>
    %c3 = arith.constant 3 : index
    %c0_13 = arith.constant 0 : index
    %c0_14 = arith.constant 0 : index
    %36 = vector.load %arg2[%c3, %c0_13, %c0_14] : memref<9x8x4xf32, #tpu.memory_space<vmem>>, vector<1x8x4xf32>
    %37 = vector.shape_cast %36 : vector<1x8x4xf32> to vector<8x4xf32>
    %cst_15 = arith.constant dense<0.000000e+00> : vector<8x256xf32>
    %38 = tpu.matmul %37, %32, %cst_15 {dimension_numbers = #tpu.dot_dimension_numbers<[1], [0], [0], [1], [0, 0, 1, 1], [], []>} : vector<8x4xf32>, vector<4x256xf32>, vector<8x256xf32> -> vector<8x256xf32>
    %39 = arith.addf %26, %38 : vector<8x256xf32>
    %c4 = arith.constant 4 : index
    %c0_16 = arith.constant 0 : index
    %c0_17 = arith.constant 0 : index
    %40 = vector.load %arg2[%c4, %c0_16, %c0_17] : memref<9x8x4xf32, #tpu.memory_space<vmem>>, vector<1x8x4xf32>
    %41 = vector.shape_cast %40 : vector<1x8x4xf32> to vector<8x4xf32>
    %cst_18 = arith.constant dense<0.000000e+00> : vector<8x256xf32>
    %42 = tpu.matmul %41, %28, %cst_18 {dimension_numbers = #tpu.dot_dimension_numbers<[1], [0], [0], [1], [0, 0, 1, 1], [], []>} : vector<8x4xf32>, vector<4x256xf32>, vector<8x256xf32> -> vector<8x256xf32>
    %43 = arith.addf %39, %42 : vector<8x256xf32>
    %c5 = arith.constant 5 : index
    %c0_19 = arith.constant 0 : index
    %c0_20 = arith.constant 0 : index
    %44 = vector.load %arg2[%c5, %c0_19, %c0_20] : memref<9x8x4xf32, #tpu.memory_space<vmem>>, vector<1x8x4xf32>
    %45 = vector.shape_cast %44 : vector<1x8x4xf32> to vector<8x4xf32>
    %cst_21 = arith.constant dense<0.000000e+00> : vector<8x256xf32>
    %46 = tpu.matmul %45, %35, %cst_21 {dimension_numbers = #tpu.dot_dimension_numbers<[1], [0], [0], [1], [0, 0, 1, 1], [], []>} : vector<8x4xf32>, vector<4x256xf32>, vector<8x256xf32> -> vector<8x256xf32>
    %47 = arith.addf %43, %46 : vector<8x256xf32>
    %48 = vector.extract_strided_slice %6 {offsets = [0, 32], sizes = [4, 256], strides = [1, 1]} : vector<4x290xf32> to vector<4x256xf32>
    %49 = vector.extract_strided_slice %6 {offsets = [0, 33], sizes = [4, 256], strides = [1, 1]} : vector<4x290xf32> to vector<4x256xf32>
    %50 = vector.extract_strided_slice %6 {offsets = [0, 34], sizes = [4, 256], strides = [1, 1]} : vector<4x290xf32> to vector<4x256xf32>
    %51 = vector.shape_cast %2 : vector<1x256xi1> to vector<1x256xi1>
    %52 = vector.broadcast %51 : vector<1x256xi1> to vector<4x256xi1>
    %53 = arith.select %52, %50, %48 : vector<4x256xi1>, vector<4x256xf32>
    %54 = vector.shape_cast %4 : vector<1x256xi1> to vector<1x256xi1>
    %55 = vector.broadcast %54 : vector<1x256xi1> to vector<4x256xi1>
    %56 = arith.select %55, %48, %50 : vector<4x256xi1>, vector<4x256xf32>
    %c6 = arith.constant 6 : index
    %c0_22 = arith.constant 0 : index
    %c0_23 = arith.constant 0 : index
    %57 = vector.load %arg2[%c6, %c0_22, %c0_23] : memref<9x8x4xf32, #tpu.memory_space<vmem>>, vector<1x8x4xf32>
    %58 = vector.shape_cast %57 : vector<1x8x4xf32> to vector<8x4xf32>
    %cst_24 = arith.constant dense<0.000000e+00> : vector<8x256xf32>
    %59 = tpu.matmul %58, %53, %cst_24 {dimension_numbers = #tpu.dot_dimension_numbers<[1], [0], [0], [1], [0, 0, 1, 1], [], []>} : vector<8x4xf32>, vector<4x256xf32>, vector<8x256xf32> -> vector<8x256xf32>
    %60 = arith.addf %47, %59 : vector<8x256xf32>
    %c7 = arith.constant 7 : index
    %c0_25 = arith.constant 0 : index
    %c0_26 = arith.constant 0 : index
    %61 = vector.load %arg2[%c7, %c0_25, %c0_26] : memref<9x8x4xf32, #tpu.memory_space<vmem>>, vector<1x8x4xf32>
    %62 = vector.shape_cast %61 : vector<1x8x4xf32> to vector<8x4xf32>
    %cst_27 = arith.constant dense<0.000000e+00> : vector<8x256xf32>
    %63 = tpu.matmul %62, %49, %cst_27 {dimension_numbers = #tpu.dot_dimension_numbers<[1], [0], [0], [1], [0, 0, 1, 1], [], []>} : vector<8x4xf32>, vector<4x256xf32>, vector<8x256xf32> -> vector<8x256xf32>
    %64 = arith.addf %60, %63 : vector<8x256xf32>
    %c8 = arith.constant 8 : index
    %c0_28 = arith.constant 0 : index
    %c0_29 = arith.constant 0 : index
    %65 = vector.load %arg2[%c8, %c0_28, %c0_29] : memref<9x8x4xf32, #tpu.memory_space<vmem>>, vector<1x8x4xf32>
    %66 = vector.shape_cast %65 : vector<1x8x4xf32> to vector<8x4xf32>
    %cst_30 = arith.constant dense<0.000000e+00> : vector<8x256xf32>
    %67 = tpu.matmul %66, %56, %cst_30 {dimension_numbers = #tpu.dot_dimension_numbers<[1], [0], [0], [1], [0, 0, 1, 1], [], []>} : vector<8x4xf32>, vector<4x256xf32>, vector<8x256xf32> -> vector<8x256xf32>
    %68 = arith.addf %64, %67 : vector<8x256xf32>
    %cst_31 = arith.constant dense<0.000000e+00> : vector<8xf32>
    %69 = vector.multi_reduction <add>, %68, %cst_31 [1] : vector<8x256xf32> to vector<8xf32>
    %70 = vector.shape_cast %69 : vector<8xf32> to vector<8x1xf32>
    %cst_32 = arith.constant 3.906250e-03 : f32
    %71 = vector.broadcast %cst_32 : f32 to vector<8x1xf32>
    %72 = arith.mulf %70, %71 : vector<8x1xf32>
    %73 = vector.broadcast %72 : vector<8x1xf32> to vector<8x256xf32>
    %74 = arith.subf %68, %73 : vector<8x256xf32>
    %75 = arith.mulf %74, %74 : vector<8x256xf32>
    %cst_33 = arith.constant dense<0.000000e+00> : vector<8xf32>
    %76 = vector.multi_reduction <add>, %75, %cst_33 [1] : vector<8x256xf32> to vector<8xf32>
    %77 = vector.shape_cast %76 : vector<8xf32> to vector<8x1xf32>
    %cst_34 = arith.constant 3.906250e-03 : f32
    %78 = vector.broadcast %cst_34 : f32 to vector<8x1xf32>
    %79 = arith.mulf %77, %78 : vector<8x1xf32>
    %cst_35 = arith.constant 9.99999974E-6 : f32
    %80 = vector.broadcast %cst_35 : f32 to vector<8x1xf32>
    %81 = arith.addf %79, %80 : vector<8x1xf32>
    %82 = math.rsqrt %81 : vector<8x1xf32>
    %83 = vector.broadcast %82 : vector<8x1xf32> to vector<8x256xf32>
    %84 = arith.mulf %74, %83 : vector<8x256xf32>
    %cst_36 = arith.constant 0.000000e+00 : f32
    %85 = vector.broadcast %cst_36 : f32 to vector<8x256xf32>
    %86 = arith.maximumf %84, %85 : vector<8x256xf32>
    %c0_37 = arith.constant 0 : index
    %c0_38 = arith.constant 0 : index
    %c0_39 = arith.constant 0 : index
    %87 = vector.load %arg4[%c0_37, %c0_38, %c0_39] : memref<1x8x256xf32, #tpu.memory_space<vmem>>, vector<1x8x256xf32>
    %88 = vector.shape_cast %87 : vector<1x8x256xf32> to vector<8x256xf32>
    %89 = vector.shape_cast %86 : vector<8x256xf32> to vector<1x8x256xf32>
    tpu.vector_store %arg4[%c0_37, %c0_38, %c0_39], %89 {strides = array<i32>} : memref<1x8x256xf32, #tpu.memory_space<vmem>>, vector<1x8x256xf32>,
    return
  }
  func.func @transform_0(%arg0: i32) -> (i32, i32, i32) {
    %c0_i32 = arith.constant 0 : i32
    %c0_i32_0 = arith.constant 0 : i32
    %c0_i32_1 = arith.constant 0 : i32
    return %arg0, %c0_i32, %c0_i32_0 : i32, i32, i32
  }
  func.func @transform_1(%arg0: i32) -> (i32, i32, i32) {
    %c0_i32 = arith.constant 0 : i32
    %c0_i32_0 = arith.constant 0 : i32
    %c0_i32_1 = arith.constant 0 : i32
    %c0_i32_2 = arith.constant 0 : i32
    return %c0_i32, %c0_i32_0, %c0_i32_1 : i32, i32, i32
  }
  func.func @transform_2(%arg0: i32) -> (i32, i32) {
    %c0_i32 = arith.constant 0 : i32
    %c0_i32_0 = arith.constant 0 : i32
    %c0_i32_1 = arith.constant 0 : i32
    return %c0_i32, %c0_i32_0 : i32, i32
  }
  func.func @transform_3(%arg0: i32) -> (i32, i32, i32) {
    %c0_i32 = arith.constant 0 : i32
    %c0_i32_0 = arith.constant 0 : i32
    %c0_i32_1 = arith.constant 0 : i32
    return %arg0, %c0_i32, %c0_i32_0 : i32, i32, i32
  }
}

</mosaic_0001>

<llo_original>
// kernel: tpu_custom_call.1
$region0: #{tpu_custom_call.1}
  #allocation0 [shape = 'u32[]', space=smem, size = 0x4, offset = 0x4, fixed_abs, tag = 'smem constant byte address 0x4 - core index']
  #allocation1 [shape = 'u32[72,128]{1,0:T(1,128)}', space=vmem, size = 0x9000, scoped, tag = 'internal scratch']
  %s0 = inlined_call_operand.vmem [shape: f32[2,4,290], index: 0, kind: input, shape index: {}]
  %s1 = inlined_call_operand.vmem [shape: f32[9,8,4], index: 1, kind: input, shape index: {}]
  %s2 = inlined_call_operand.vmem [shape: s32[1,256], index: 2, kind: input, shape index: {}]
  %s3 = inlined_call_operand.hbm [shape: f32[2,8,256], index: 3, kind: output, shape index: {}]
  %s4 = sld [smem:[#allocation0]]
  $region45: #{tpu_custom_call.1} parent=0
    _
  %s6 = ssub.s32 1, %s4
  %s7 = scalar_select 0, %s6, %s4
  $region1: #{tpu_custom_call.1} parent=0
    #allocation2 [shape = 'u8[16384]{0}', space=vmem, size = 0x4000, scoped, tag = 'output window, operand 0']
    #allocation3 [shape = 's32[2]{0}', space=sflag, size = 0x8, scoped, tag = 'scoped memory for tpu_custom_call.1']
    %8 = vsyncpa [#allocation3], 0
    %s9 = scalar_lea.sflag [#allocation3], 1
    %10 = vsyncpa %s9, 0
    loop: start=0, step=1, limit=4
    $region2: #{tpu_custom_call.1} parent=1 // loop_pre_header
      _
    $region3: #{tpu_custom_call.1} parent=1 // loop_header
      %s12 = sphi 0, %s16
      %p13 = scmp.ge.s32.totalorder %s12, 4
      %s22 = sphi 0, %s24
      %s25 = sphi 0, %s22
      %s26 = sphi 0, %s25
      %s42 = sphi 0, %s26
      %s46 = sphi 0, %s46
      %s48 = sphi 0, %s46
      %s49 = sphi 0, %s48
      %s63 = sphi 0, %s49
      %s67 = sphi 0, %s67
      %s69 = sphi 0, %s67
      %s70 = sphi 0, %s69
      %s84 = sphi 0, %s70
      %s90 = sphi 0, %s92
      %s93 = sphi 0, %s90
      %s94 = sphi 0, %s93
      %s110 = sphi 0, %s94
    $region4: #{tpu_custom_call.1} parent=1 // loop_header_branch
      %15 = sbr.rel (%p13) target = $region8
    $region5: #{tpu_custom_call.1} parent=1 // loop_body
      %s17 = ssub.s32 %s12, 1
      %s18 = ssub.s32 %s12, 2
      %s19 = sadd.s32 %s12, 1
      %s20 = ssub.s32 %s12, %s19
      %p21 = scmp.eq.s32.totalorder %s20, 0
      %s23 = sadd.s32 %s22, 1
      %s24 = scalar_select %p21, %s22, %s23
      %p27 = pneg %p21
      %p28 = scmp.eq.s32.totalorder %s12, 1
      %p29 = por %p27, %p28
      %p30 = scmp.ne.s32.totalorder %s22, %s25
      %p31 = scmp.eq.s32.totalorder %s12, 0
      %p32 = por %p30, %p31
      %p33 = scmp.ne.s32.totalorder %s22, %s25
      %p34 = scmp.eq.s32.totalorder %s17, 1
      %p35 = por %p33, %p34
      %p36 = scmp.ne.s32.totalorder %s25, %s26
      %p37 = scmp.eq.s32.totalorder %s17, 0
      %p38 = por %p36, %p37
      %p39 = scmp.ne.s32.totalorder %s25, %s26
      %p40 = scmp.eq.s32.totalorder %s18, 1
      %p41 = por %p39, %p40
      %p43 = scmp.ne.s32.totalorder %s26, %s42
      %p44 = scmp.eq.s32.totalorder %s18, 0
      %p45 = por %p43, %p44
      %s47 = sadd.s32 %s46, 1
      %p50 = scmp.eq.s32.totalorder %s12, 1
      %p51 = scmp.ne.s32.totalorder %s46, %s48
      %p52 = scmp.eq.s32.totalorder %s12, 0
      %p53 = por %p51, %p52
      %p54 = scmp.ne.s32.totalorder %s46, %s48
      %p55 = scmp.eq.s32.totalorder %s17, 1
      %p56 = por %p54, %p55
      %p57 = scmp.ne.s32.totalorder %s48, %s49
      %p58 = scmp.eq.s32.totalorder %s17, 0
      %p59 = por %p57, %p58
      %p60 = scmp.ne.s32.totalorder %s48, %s49
      %p61 = scmp.eq.s32.totalorder %s18, 1
      %p62 = por %p60, %p61
      %p64 = scmp.ne.s32.totalorder %s49, %s63
      %p65 = scmp.eq.s32.totalorder %s18, 0
      %p66 = por %p64, %p65
      %s68 = sadd.s32 %s67, 1
      %p71 = scmp.eq.s32.totalorder %s12, 1
      %p72 = scmp.ne.s32.totalorder %s67, %s69
      %p73 = scmp.eq.s32.totalorder %s12, 0
      %p74 = por %p72, %p73
      %p75 = scmp.ne.s32.totalorder %s67, %s69
      %p76 = scmp.eq.s32.totalorder %s17, 1
      %p77 = por %p75, %p76
      %p78 = scmp.ne.s32.totalorder %s69, %s70
      %p79 = scmp.eq.s32.totalorder %s17, 0
      %p80 = por %p78, %p79
      %p81 = scmp.ne.s32.totalorder %s69, %s70
      %p82 = scmp.eq.s32.totalorder %s18, 1
      %p83 = por %p81, %p82
      %p85 = scmp.ne.s32.totalorder %s70, %s84
      %p86 = scmp.eq.s32.totalorder %s18, 0
      %p87 = por %p85, %p86
      %s88 = ssub.s32 %s12, %s19
      %p89 = scmp.eq.s32.totalorder %s88, 0
      %s91 = sadd.s32 %s90, 1
      %s92 = scalar_select %p89, %s90, %s91
      %p95 = pneg %p89
      %p96 = scmp.eq.s32.totalorder %s12, 1
      %p97 = por %p95, %p96
      %p98 = scmp.ne.s32.totalorder %s90, %s93
      %p99 = scmp.eq.s32.totalorder %s12, 0
      %p100 = por %p98, %p99
      %p101 = scmp.ne.s32.totalorder %s90, %s93
      %p102 = scmp.eq.s32.totalorder %s17, 1
      %p103 = por %p101, %p102
      %p104 = scmp.ne.s32.totalorder %s93, %s94
      %p105 = scmp.eq.s32.totalorder %s17, 0
      %p106 = por %p104, %p105
      %p107 = scmp.ne.s32.totalorder %s93, %s94
      %p108 = scmp.eq.s32.totalorder %s18, 1
      %p109 = por %p107, %p108
      %p111 = scmp.ne.s32.totalorder %s94, %s110
      %p112 = scmp.eq.s32.totalorder %s18, 0
      %p113 = por %p111, %p112
      %p114 = scmp.le.s32.totalorder 1, %s12
      %p115 = scmp.lt.s32.totalorder %s12, 3
      %p116 = pnand %p114, %p115
      %p117 = pneg %p116
      // Predicated region
      $region9: #{tpu_custom_call.1} parent=5 // pred_check
        _
      $region10: #{tpu_custom_call.1} parent=5 // pred_check_branch
        %119 = sbr.rel (%p116) target = $region12
      $region11: #{tpu_custom_call.1} parent=5 // pred_region
        %s120 = ssub.s32 %s12, 1
        // Predicated region
        $region13: #{tpu_custom_call.1} parent=11 // pred_check
          %p121 = pneg %p59
        $region14: #{tpu_custom_call.1} parent=11 // pred_check_branch
          %123 = sbr.rel (%p121) target = $region16
        $region15: #{tpu_custom_call.1} parent=11 // pred_region
          _
        $region16: #{tpu_custom_call.1} parent=11 // pred_fallthru
          _
        // Predicated region
        $region17: #{tpu_custom_call.1} parent=11 // pred_check
          %p124 = pneg %p80
        $region18: #{tpu_custom_call.1} parent=11 // pred_check_branch
          %126 = sbr.rel (%p124) target = $region20
        $region19: #{tpu_custom_call.1} parent=11 // pred_region
          _
        $region20: #{tpu_custom_call.1} parent=11 // pred_fallthru
          _
      $region12: #{tpu_custom_call.1} parent=5 // pred_fallthru
        _
      %p127 = scmp.lt.s32.totalorder %s12, 2
      // Predicated region
      $region21: #{tpu_custom_call.1} parent=5 // pred_check
        %p128 = pneg %p127
      $region22: #{tpu_custom_call.1} parent=5 // pred_check_branch
        %130 = sbr.rel (%p128) target = $region24
      $region23: #{tpu_custom_call.1} parent=5 // pred_region
        // Predicated region
        $region25: #{tpu_custom_call.1} parent=23 // pred_check
          %p131 = pneg %p32
        $region26: #{tpu_custom_call.1} parent=23 // pred_check_branch
          %133 = sbr.rel (%p131) target = $region28
        $region27: #{tpu_custom_call.1} parent=23 // pred_region
          %p134 = scmp.lt.s32.totalorder %s12, 1
          %s135 = scalar_select %p134, %s12, 1
          %s136 = smul.addr %s135, 3
          %s137 = smul.addr %s136, 4
          %s138 = scalar_lea.vmem %s0, %s137
        $region28: #{tpu_custom_call.1} parent=23 // pred_fallthru
          _
      $region24: #{tpu_custom_call.1} parent=5 // pred_fallthru
        _
      %p139 = scmp.le.s32.totalorder 1, %s12
      %p140 = scmp.lt.s32.totalorder %s12, 3
      %p141 = pnand %p139, %p140
      %p142 = pneg %p141
      // Predicated region
      $region29: #{tpu_custom_call.1} parent=5 // pred_check
        _
      $region30: #{tpu_custom_call.1} parent=5 // pred_check_branch
        %144 = sbr.rel (%p141) target = $region32
      $region31: #{tpu_custom_call.1} parent=5 // pred_region
        %s145 = ssub.s32 %s12, 1
        %p146 = scmp.lt.s32.totalorder %s17, 1
        %s147 = scalar_select %p146, %s17, 1
        %s148 = smul.addr %s147, 3
        %s149 = smul.addr %s148, 4
        %s150 = scalar_lea.vmem %s0, %s149
        %p151 = pneg %p38
        %p152 = pneg %p35
        %p153 = pneg %p59
        %p154 = pneg %p56
        %p155 = pneg %p80
        %p156 = pneg %p77
        %p157 = pneg %p106
        %p158 = pneg %p103
        %s159 = sand.u32 %s93, 1
        %s160 = scalar_lea.sflag [#allocation3], %s159
        %s161 = sand.u32 %s93, 1
        %s162 = smul.addr %s161, 16
        %s163 = scalar_lea.vmem [#allocation2], %s162
        %p164 = scmp.lt.s32.totalorder %s17, 1
        %s165 = scalar_select %p164, %s17, 1
        %s166 = smul.addr %s165, 3
        %s167 = smul.addr %s166, 4
        %s168 = scalar_lea.vmem %s0, %s167
        %v169 = vld [vmem:[%s2] sm:$0x3]
        %vm170 = vcmp.eq.s32.totalorder %v169, 0
        %vm171 = vcmp.eq.s32.totalorder %v169, 15
        %v172 = vld [vmem:[%s168] sm:$0xff]
        %v173 = vld [vmem:[%s168 + $0x8] sm:$0xf]
        %v174 = vsel %vm170, 1, 0
        %v175 = vperm.slane %v174, 0
        %v176 = vperm.slane %v174, 1
        %vm177 = vcmp.eq.s32.totalorder %v175, 1
        %vm178 = vcmp.eq.s32.totalorder %v176, 1
        %181 = vst [vmem:[#allocation1] ss:$2 sm:$0xff] %v172
        %s182 = scalar_lea.vmem [#allocation1], 16
        %183 = vst [vmem:[%s182] ss:$2 sm:$0xff] %v173
        %v184 = vld.sshfl [vmem:[#allocation1] sm:$0xff pattern:$0x75316420]
        %v185 = vld.sshfl [vmem:[#allocation1 + $0x8] sm:$0xff pattern:$0x75316420]
        %v186 = vld.sshfl [vmem:[#allocation1 + $0x10] sm:$0xff pattern:$0x75316420]
        %187 = vrot.lane.b32.xlu0 %v184, 126
        %v188 = vpop.permute.xlu0 %187
        %189 = vrot.lane.b32.xlu0 %v185, 126
        %v190 = vpop.permute.xlu0 %189
        %191 = vrot.lane.b32.xlu0 %v186, 126
        %v192 = vpop.permute.xlu0 %191
        %vm193 = vcmask 1031168
        %v194 = vsel %vm193, %v188, %v190
        %v195 = vsel %vm193, %v190, %v192
        %198 = vst [vmem:[#allocation1] ss:$2 sm:$0xff] %v172
        %v199 = vld.sshfl [vmem:[#allocation1] sm:$0xff pattern:$0x75316420]
        %v200 = vld.sshfl [vmem:[#allocation1 + $0x8] sm:$0xff pattern:$0x75316420]
        %v203 = vsel %vm177, %v194, %v199
        %v204 = vsel %vm178, %v195, %v200
        %v205 = vsel %vm171, 1, 0
        %v206 = vperm.slane %v205, 0
        %v207 = vperm.slane %v205, 1
        %vm208 = vcmp.eq.s32.totalorder %v206, 1
        %vm209 = vcmp.eq.s32.totalorder %v207, 1
        %210 = vst [vmem:[#allocation1] ss:$2 sm:$0xff] %v172
        %v211 = vld.sshfl [vmem:[#allocation1] sm:$0xff pattern:$0x75316420]
        %v212 = vld.sshfl [vmem:[#allocation1 + $0x8] sm:$0xff pattern:$0x75316420]
        %215 = vst [vmem:[#allocation1] ss:$2 sm:$0xff] %v172
        %s216 = scalar_lea.vmem [#allocation1], 16
        %217 = vst [vmem:[%s216] ss:$2 sm:$0xff] %v173
        %v218 = vld.sshfl [vmem:[#allocation1] sm:$0xff pattern:$0x75316420]
        %v219 = vld.sshfl [vmem:[#allocation1 + $0x8] sm:$0xff pattern:$0x75316420]
        %v220 = vld.sshfl [vmem:[#allocation1 + $0x10] sm:$0xff pattern:$0x75316420]
        %221 = vrot.lane.b32.xlu0 %v218, 126
        %v222 = vpop.permute.xlu0 %221
        %223 = vrot.lane.b32.xlu0 %v219, 126
        %v224 = vpop.permute.xlu0 %223
        %225 = vrot.lane.b32.xlu0 %v220, 126
        %v226 = vpop.permute.xlu0 %225
        %v227 = vsel %vm193, %v222, %v224
        %v228 = vsel %vm193, %v224, %v226
        %v231 = vsel %vm208, %v211, %v227
        %v232 = vsel %vm209, %v212, %v228
        %v233 = vld [vmem:[%s1] sm:$0xff]
        %s234 = scalar_lea.vmem %s1, 8
        %v235 = vld [vmem:[%s234] sm:$0xff]
        %236 = vst [vmem:[#allocation1] ss:$2 sm:$0xff] %v172
        %s237 = scalar_lea.vmem [#allocation1], 16
        %238 = vst [vmem:[%s237] ss:$2 sm:$0xff] %v173
        %v239 = vld.sshfl [vmem:[#allocation1] sm:$0xff pattern:$0x75316420]
        %v240 = vld.sshfl [vmem:[#allocation1 + $0x8] sm:$0xff pattern:$0x75316420]
        %v241 = vld.sshfl [vmem:[#allocation1 + $0x10] sm:$0xff pattern:$0x75316420]
        %242 = vrot.lane.b32.xlu0 %v239, 127
        %v243 = vpop.permute.xlu0 %242
        %244 = vrot.lane.b32.xlu0 %v240, 127
        %v245 = vpop.permute.xlu0 %244
        %246 = vrot.lane.b32.xlu0 %v241, 127
        %v247 = vpop.permute.xlu0 %246
        %vm248 = vcmask 1039360
        %v249 = vsel %vm248, %v243, %v245
        %v250 = vsel %vm248, %v245, %v247
        %vm251 = vcmask 31744
        %v253 = vsel %vm251, %v235, 0
        %vm255 = vcmask 1043456
        %v256 = vsel %vm255, %v249, 0
        %v258 = vsel %vm255, %v250, 0
        %260 = vmatpush.msra.mxu0 0.0
        %261 = vmatpush.msra.mxu0 0.0
        %262 = vmatpush.msra.mxu0 0.0
        %263 = vmatpush.msra.mxu0 0.0
        %264 = vmatpush.msra.mxu0 0.0
        %265 = vmatpush.msra.mxu0 0.0
        %266 = vmatpush.msra.mxu0 0.0
        %267 = vmatpush.msra.mxu0 0.0
        %268 = vmatpush.msra.mxu0 0.0
        %269 = vmatpush.msra.mxu0 0.0
        %270 = vmatpush.msra.mxu0 0.0
        %271 = vmatpush.msra.mxu0 0.0
        %272 = vmatpush.msra.mxu0 0.0
        %273 = vmatpush.msra.mxu0 0.0
        %274 = vmatpush.msra.mxu0 0.0
        %275 = vmatpush.msra.mxu0 %v256
        %276 = vmatmul.f32.gmra.mxu0 %v253
        %v277 = vpop.f32.mrf.mxu0
        %v278 = vadd.f32 0.0, %v277
        %279 = vdwg.mxu0
        %280 = vmatpush.msra.mxu0 0.0
        %281 = vmatpush.msra.mxu0 0.0
        %282 = vmatpush.msra.mxu0 0.0
        %283 = vmatpush.msra.mxu0 0.0
        %284 = vmatpush.msra.mxu0 0.0
        %285 = vmatpush.msra.mxu0 0.0
        %286 = vmatpush.msra.mxu0 0.0
        %287 = vmatpush.msra.mxu0 0.0
        %288 = vmatpush.msra.mxu0 0.0
        %289 = vmatpush.msra.mxu0 0.0
        %290 = vmatpush.msra.mxu0 0.0
        %291 = vmatpush.msra.mxu0 0.0
        %292 = vmatpush.msra.mxu0 0.0
        %293 = vmatpush.msra.mxu0 0.0
        %294 = vmatpush.msra.mxu0 0.0
        %295 = vmatpush.msra.mxu0 %v258
        %296 = vmatmul.f32.gmra.mxu0 %v253
        %v297 = vpop.f32.mrf.mxu0
        %v298 = vadd.f32 0.0, %v297
        %299 = vdwg.mxu0
        %v301 = vsel %vm251, %v233, 0
        %v304 = vsel %vm255, %v203, 0
        %v307 = vsel %vm255, %v204, 0
        %309 = vmatpush.msra.mxu0 0.0
        %310 = vmatpush.msra.mxu0 0.0
        %311 = vmatpush.msra.mxu0 0.0
        %312 = vmatpush.msra.mxu0 0.0
        %313 = vmatpush.msra.mxu0 0.0
        %314 = vmatpush.msra.mxu0 0.0
        %315 = vmatpush.msra.mxu0 0.0
        %316 = vmatpush.msra.mxu0 0.0
        %317 = vmatpush.msra.mxu0 0.0
        %318 = vmatpush.msra.mxu0 0.0
        %319 = vmatpush.msra.mxu0 0.0
        %320 = vmatpush.msra.mxu0 0.0
        %321 = vmatpush.msra.mxu0 0.0
        %322 = vmatpush.msra.mxu0 0.0
        %323 = vmatpush.msra.mxu0 0.0
        %324 = vmatpush.msra.mxu0 %v304
        %325 = vmatmul.f32.gmra.mxu0 %v301
        %v326 = vpop.f32.mrf.mxu0
        %v327 = vadd.f32 %v278, %v326
        %328 = vdwg.mxu0
        %329 = vmatpush.msra.mxu0 0.0
        %330 = vmatpush.msra.mxu0 0.0
        %331 = vmatpush.msra.mxu0 0.0
        %332 = vmatpush.msra.mxu0 0.0
        %333 = vmatpush.msra.mxu0 0.0
        %334 = vmatpush.msra.mxu0 0.0
        %335 = vmatpush.msra.mxu0 0.0
        %336 = vmatpush.msra.mxu0 0.0
        %337 = vmatpush.msra.mxu0 0.0
        %338 = vmatpush.msra.mxu0 0.0
        %339 = vmatpush.msra.mxu0 0.0
        %340 = vmatpush.msra.mxu0 0.0
        %341 = vmatpush.msra.mxu0 0.0
        %342 = vmatpush.msra.mxu0 0.0
        %343 = vmatpush.msra.mxu0 0.0
        %344 = vmatpush.msra.mxu0 %v307
        %345 = vmatmul.f32.gmra.mxu0 %v301
        %v346 = vpop.f32.mrf.mxu0
        %v347 = vadd.f32 %v298, %v346
        %348 = vdwg.mxu0
        %s349 = scalar_lea.vmem %s1, 16
        %v350 = vld [vmem:[%s349] sm:$0xff]
        %v352 = vsel %vm251, %v350, 0
        %v355 = vsel %vm255, %v231, 0
        %v358 = vsel %vm255, %v232, 0
        %360 = vmatpush.msra.mxu0 0.0
        %361 = vmatpush.msra.mxu0 0.0
        %362 = vmatpush.msra.mxu0 0.0
        %363 = vmatpush.msra.mxu0 0.0
        %364 = vmatpush.msra.mxu0 0.0
        %365 = vmatpush.msra.mxu0 0.0
        %366 = vmatpush.msra.mxu0 0.0
        %367 = vmatpush.msra.mxu0 0.0
        %368 = vmatpush.msra.mxu0 0.0
        %369 = vmatpush.msra.mxu0 0.0
        %370 = vmatpush.msra.mxu0 0.0
        %371 = vmatpush.msra.mxu0 0.0
        %372 = vmatpush.msra.mxu0 0.0
        %373 = vmatpush.msra.mxu0 0.0
        %374 = vmatpush.msra.mxu0 0.0
        %375 = vmatpush.msra.mxu0 %v355
        %376 = vmatmul.f32.gmra.mxu0 %v352
        %v377 = vpop.f32.mrf.mxu0
        %v378 = vadd.f32 0.0, %v377
        %379 = vdwg.mxu0
        %380 = vmatpush.msra.mxu0 0.0
        %381 = vmatpush.msra.mxu0 0.0
        %382 = vmatpush.msra.mxu0 0.0
        %383 = vmatpush.msra.mxu0 0.0
        %384 = vmatpush.msra.mxu0 0.0
        %385 = vmatpush.msra.mxu0 0.0
        %386 = vmatpush.msra.mxu0 0.0
        %387 = vmatpush.msra.mxu0 0.0
        %388 = vmatpush.msra.mxu0 0.0
        %389 = vmatpush.msra.mxu0 0.0
        %390 = vmatpush.msra.mxu0 0.0
        %391 = vmatpush.msra.mxu0 0.0
        %392 = vmatpush.msra.mxu0 0.0
        %393 = vmatpush.msra.mxu0 0.0
        %394 = vmatpush.msra.mxu0 0.0
        %395 = vmatpush.msra.mxu0 %v358
        %396 = vmatmul.f32.gmra.mxu0 %v352
        %v397 = vpop.f32.mrf.mxu0
        %v398 = vadd.f32 0.0, %v397
        %399 = vdwg.mxu0
        %v400 = vadd.f32 %v327, %v378
        %v401 = vadd.f32 %v347, %v398
        %402 = vst [vmem:[#allocation1] ss:$2 sm:$0xff] %v172
        %s403 = scalar_lea.vmem [#allocation1], 16
        %404 = vst [vmem:[%s403] ss:$2 sm:$0xff] %v173
        %v405 = vld.sshfl [vmem:[#allocation1] sm:$0xff pattern:$0x75316420]
        %v406 = vld.sshfl [vmem:[#allocation1 + $0x8] sm:$0xff pattern:$0x75316420]
        %v407 = vld.sshfl [vmem:[#allocation1 + $0x10] sm:$0xff pattern:$0x75316420]
        %408 = vrot.lane.b32.xlu0 %v405, 110
        %v409 = vpop.permute.xlu0 %408
        %410 = vrot.lane.b32.xlu0 %v406, 110
        %v411 = vpop.permute.xlu0 %410
        %412 = vrot.lane.b32.xlu0 %v407, 110
        %v413 = vpop.permute.xlu0 %412
        %vm414 = vcmask 900096
        %v415 = vsel %vm414, %v409, %v411
        %v416 = vsel %vm414, %v411, %v413
        %419 = vst [vmem:[#allocation1] ss:$2 sm:$0xff] %v172
        %s420 = scalar_lea.vmem [#allocation1], 16
        %421 = vst [vmem:[%s420] ss:$2 sm:$0xff] %v173
        %v422 = vld.sshfl [vmem:[#allocation1] sm:$0xff pattern:$0x75316420]
        %v423 = vld.sshfl [vmem:[#allocation1 + $0x8] sm:$0xff pattern:$0x75316420]
        %v424 = vld.sshfl [vmem:[#allocation1 + $0x10] sm:$0xff pattern:$0x75316420]
        %425 = vrot.lane.b32.xlu0 %v422, 112
        %v426 = vpop.permute.xlu0 %425
        %427 = vrot.lane.b32.xlu0 %v423, 112
        %v428 = vpop.permute.xlu0 %427
        %429 = vrot.lane.b32.xlu0 %v424, 112
        %v430 = vpop.permute.xlu0 %429
        %vm431 = vcmask 916480
        %v432 = vsel %vm431, %v426, %v428
        %v433 = vsel %vm431, %v428, %v430
        %v436 = vsel %vm177, %v415, %v432
        %v437 = vsel %vm178, %v416, %v433
        %438 = vst [vmem:[#allocation1] ss:$2 sm:$0xff] %v172
        %s439 = scalar_lea.vmem [#allocation1], 16
        %440 = vst [vmem:[%s439] ss:$2 sm:$0xff] %v173
        %v441 = vld.sshfl [vmem:[#allocation1] sm:$0xff pattern:$0x75316420]
        %v442 = vld.sshfl [vmem:[#allocation1 + $0x8] sm:$0xff pattern:$0x75316420]
        %v443 = vld.sshfl [vmem:[#allocation1 + $0x10] sm:$0xff pattern:$0x75316420]
        %444 = vrot.lane.b32.xlu0 %v441, 112
        %v445 = vpop.permute.xlu0 %444
        %446 = vrot.lane.b32.xlu0 %v442, 112
        %v447 = vpop.permute.xlu0 %446
        %448 = vrot.lane.b32.xlu0 %v443, 112
        %v449 = vpop.permute.xlu0 %448
        %v450 = vsel %vm431, %v445, %v447
        %v451 = vsel %vm431, %v447, %v449
        %454 = vst [vmem:[#allocation1] ss:$2 sm:$0xff] %v172
        %s455 = scalar_lea.vmem [#allocation1], 16
        %456 = vst [vmem:[%s455] ss:$2 sm:$0xff] %v173
        %v457 = vld.sshfl [vmem:[#allocation1] sm:$0xff pattern:$0x75316420]
        %v458 = vld.sshfl [vmem:[#allocation1 + $0x8] sm:$0xff pattern:$0x75316420]
        %v459 = vld.sshfl [vmem:[#allocation1 + $0x10] sm:$0xff pattern:$0x75316420]
        %460 = vrot.lane.b32.xlu0 %v457, 110
        %v461 = vpop.permute.xlu0 %460
        %462 = vrot.lane.b32.xlu0 %v458, 110
        %v463 = vpop.permute.xlu0 %462
        %464 = vrot.lane.b32.xlu0 %v459, 110
        %v465 = vpop.permute.xlu0 %464
        %v466 = vsel %vm414, %v461, %v463
        %v467 = vsel %vm414, %v463, %v465
        %v470 = vsel %vm208, %v450, %v466
        %v471 = vsel %vm209, %v451, %v467
        %s472 = scalar_lea.vmem %s1, 24
        %v473 = vld [vmem:[%s472] sm:$0xff]
        %v475 = vsel %vm251, %v473, 0
        %v478 = vsel %vm255, %v436, 0
        %v481 = vsel %vm255, %v437, 0
        %483 = vmatpush.msra.mxu0 0.0
        %484 = vmatpush.msra.mxu0 0.0
        %485 = vmatpush.msra.mxu0 0.0
        %486 = vmatpush.msra.mxu0 0.0
        %487 = vmatpush.msra.mxu0 0.0
        %488 = vmatpush.msra.mxu0 0.0
        %489 = vmatpush.msra.mxu0 0.0
        %490 = vmatpush.msra.mxu0 0.0
        %491 = vmatpush.msra.mxu0 0.0
        %492 = vmatpush.msra.mxu0 0.0
        %493 = vmatpush.msra.mxu0 0.0
        %494 = vmatpush.msra.mxu0 0.0
        %495 = vmatpush.msra.mxu0 0.0
        %496 = vmatpush.msra.mxu0 0.0
        %497 = vmatpush.msra.mxu0 0.0
        %498 = vmatpush.msra.mxu0 %v478
        %499 = vmatmul.f32.gmra.mxu0 %v475
        %v500 = vpop.f32.mrf.mxu0
        %v501 = vadd.f32 0.0, %v500
        %502 = vdwg.mxu0
        %503 = vmatpush.msra.mxu0 0.0
        %504 = vmatpush.msra.mxu0 0.0
        %505 = vmatpush.msra.mxu0 0.0
        %506 = vmatpush.msra.mxu0 0.0
        %507 = vmatpush.msra.mxu0 0.0
        %508 = vmatpush.msra.mxu0 0.0
        %509 = vmatpush.msra.mxu0 0.0
        %510 = vmatpush.msra.mxu0 0.0
        %511 = vmatpush.msra.mxu0 0.0
        %512 = vmatpush.msra.mxu0 0.0
        %513 = vmatpush.msra.mxu0 0.0
        %514 = vmatpush.msra.mxu0 0.0
        %515 = vmatpush.msra.mxu0 0.0
        %516 = vmatpush.msra.mxu0 0.0
        %517 = vmatpush.msra.mxu0 0.0
        %518 = vmatpush.msra.mxu0 %v481
        %519 = vmatmul.f32.gmra.mxu0 %v475
        %v520 = vpop.f32.mrf.mxu0
        %v521 = vadd.f32 0.0, %v520
        %522 = vdwg.mxu0
        %v523 = vadd.f32 %v400, %v501
        %v524 = vadd.f32 %v401, %v521
        %s525 = scalar_lea.vmem %s1, 32
        %v526 = vld [vmem:[%s525] sm:$0xff]
        %527 = vst [vmem:[#allocation1] ss:$2 sm:$0xff] %v172
        %s528 = scalar_lea.vmem [#allocation1], 16
        %529 = vst [vmem:[%s528] ss:$2 sm:$0xff] %v173
        %v530 = vld.sshfl [vmem:[#allocation1] sm:$0xff pattern:$0x75316420]
        %v531 = vld.sshfl [vmem:[#allocation1 + $0x8] sm:$0xff pattern:$0x75316420]
        %v532 = vld.sshfl [vmem:[#allocation1 + $0x10] sm:$0xff pattern:$0x75316420]
        %533 = vrot.lane.b32.xlu0 %v530, 111
        %v534 = vpop.permute.xlu0 %533
        %535 = vrot.lane.b32.xlu0 %v531, 111
        %v536 = vpop.permute.xlu0 %535
        %537 = vrot.lane.b32.xlu0 %v532, 111
        %v538 = vpop.permute.xlu0 %537
        %vm539 = vcmask 908288
        %v540 = vsel %vm539, %v534, %v536
        %v541 = vsel %vm539, %v536, %v538
        %v543 = vsel %vm251, %v526, 0
        %v545 = vsel %vm255, %v540, 0
        %v547 = vsel %vm255, %v541, 0
        %549 = vmatpush.msra.mxu0 0.0
        %550 = vmatpush.msra.mxu0 0.0
        %551 = vmatpush.msra.mxu0 0.0
        %552 = vmatpush.msra.mxu0 0.0
        %553 = vmatpush.msra.mxu0 0.0
        %554 = vmatpush.msra.mxu0 0.0
        %555 = vmatpush.msra.mxu0 0.0
        %556 = vmatpush.msra.mxu0 0.0
        %557 = vmatpush.msra.mxu0 0.0
        %558 = vmatpush.msra.mxu0 0.0
        %559 = vmatpush.msra.mxu0 0.0
        %560 = vmatpush.msra.mxu0 0.0
        %561 = vmatpush.msra.mxu0 0.0
        %562 = vmatpush.msra.mxu0 0.0
        %563 = vmatpush.msra.mxu0 0.0
        %564 = vmatpush.msra.mxu0 %v545
        %565 = vmatmul.f32.gmra.mxu0 %v543
        %v566 = vpop.f32.mrf.mxu0
        %v567 = vadd.f32 0.0, %v566
        %568 = vdwg.mxu0
        %569 = vmatpush.msra.mxu0 0.0
        %570 = vmatpush.msra.mxu0 0.0
        %571 = vmatpush.msra.mxu0 0.0
        %572 = vmatpush.msra.mxu0 0.0
        %573 = vmatpush.msra.mxu0 0.0
        %574 = vmatpush.msra.mxu0 0.0
        %575 = vmatpush.msra.mxu0 0.0
        %576 = vmatpush.msra.mxu0 0.0
        %577 = vmatpush.msra.mxu0 0.0
        %578 = vmatpush.msra.mxu0 0.0
        %579 = vmatpush.msra.mxu0 0.0
        %580 = vmatpush.msra.mxu0 0.0
        %581 = vmatpush.msra.mxu0 0.0
        %582 = vmatpush.msra.mxu0 0.0
        %583 = vmatpush.msra.mxu0 0.0
        %584 = vmatpush.msra.mxu0 %v547
        %585 = vmatmul.f32.gmra.mxu0 %v543
        %v586 = vpop.f32.mrf.mxu0
        %v587 = vadd.f32 0.0, %v586
        %588 = vdwg.mxu0
        %v589 = vadd.f32 %v523, %v567
        %v590 = vadd.f32 %v524, %v587
        %s591 = scalar_lea.vmem %s1, 40
        %v592 = vld [vmem:[%s591] sm:$0xff]
        %v594 = vsel %vm251, %v592, 0
        %v597 = vsel %vm255, %v470, 0
        %v600 = vsel %vm255, %v471, 0
        %602 = vmatpush.msra.mxu0 0.0
        %603 = vmatpush.msra.mxu0 0.0
        %604 = vmatpush.msra.mxu0 0.0
        %605 = vmatpush.msra.mxu0 0.0
        %606 = vmatpush.msra.mxu0 0.0
        %607 = vmatpush.msra.mxu0 0.0
        %608 = vmatpush.msra.mxu0 0.0
        %609 = vmatpush.msra.mxu0 0.0
        %610 = vmatpush.msra.mxu0 0.0
        %611 = vmatpush.msra.mxu0 0.0
        %612 = vmatpush.msra.mxu0 0.0
        %613 = vmatpush.msra.mxu0 0.0
        %614 = vmatpush.msra.mxu0 0.0
        %615 = vmatpush.msra.mxu0 0.0
        %616 = vmatpush.msra.mxu0 0.0
        %617 = vmatpush.msra.mxu0 %v597
        %618 = vmatmul.f32.gmra.mxu0 %v594
        %v619 = vpop.f32.mrf.mxu0
        %v620 = vadd.f32 0.0, %v619
        %621 = vdwg.mxu0
        %622 = vmatpush.msra.mxu0 0.0
        %623 = vmatpush.msra.mxu0 0.0
        %624 = vmatpush.msra.mxu0 0.0
        %625 = vmatpush.msra.mxu0 0.0
        %626 = vmatpush.msra.mxu0 0.0
        %627 = vmatpush.msra.mxu0 0.0
        %628 = vmatpush.msra.mxu0 0.0
        %629 = vmatpush.msra.mxu0 0.0
        %630 = vmatpush.msra.mxu0 0.0
        %631 = vmatpush.msra.mxu0 0.0
        %632 = vmatpush.msra.mxu0 0.0
        %633 = vmatpush.msra.mxu0 0.0
        %634 = vmatpush.msra.mxu0 0.0
        %635 = vmatpush.msra.mxu0 0.0
        %636 = vmatpush.msra.mxu0 0.0
        %637 = vmatpush.msra.mxu0 %v600
        %638 = vmatmul.f32.gmra.mxu0 %v594
        %v639 = vpop.f32.mrf.mxu0
        %v640 = vadd.f32 0.0, %v639
        %641 = vdwg.mxu0
        %v642 = vadd.f32 %v589, %v620
        %v643 = vadd.f32 %v590, %v640
        %644 = vst [vmem:[#allocation1] ss:$2 sm:$0xff] %v172
        %s645 = scalar_lea.vmem [#allocation1], 16
        %646 = vst [vmem:[%s645] ss:$2 sm:$0xff] %v173
        %v647 = vld.sshfl [vmem:[#allocation1] sm:$0xff pattern:$0x75316420]
        %v648 = vld.sshfl [vmem:[#allocation1 + $0x8] sm:$0xff pattern:$0x75316420]
        %v649 = vld.sshfl [vmem:[#allocation1 + $0x10] sm:$0xff pattern:$0x75316420]
        %650 = vrot.lane.b32.xlu0 %v647, 94
        %v651 = vpop.permute.xlu0 %650
        %652 = vrot.lane.b32.xlu0 %v648, 94
        %v653 = vpop.permute.xlu0 %652
        %654 = vrot.lane.b32.xlu0 %v649, 94
        %v655 = vpop.permute.xlu0 %654
        %vm656 = vcmask 769024
        %v657 = vsel %vm656, %v651, %v653
        %v658 = vsel %vm656, %v653, %v655
        %661 = vst [vmem:[#allocation1] ss:$2 sm:$0xff] %v172
        %s662 = scalar_lea.vmem [#allocation1], 16
        %663 = vst [vmem:[%s662] ss:$2 sm:$0xff] %v173
        %v664 = vld.sshfl [vmem:[#allocation1] sm:$0xff pattern:$0x75316420]
        %v665 = vld.sshfl [vmem:[#allocation1 + $0x8] sm:$0xff pattern:$0x75316420]
        %v666 = vld.sshfl [vmem:[#allocation1 + $0x10] sm:$0xff pattern:$0x75316420]
        %667 = vrot.lane.b32.xlu0 %v664, 96
        %v668 = vpop.permute.xlu0 %667
        %669 = vrot.lane.b32.xlu0 %v665, 96
        %v670 = vpop.permute.xlu0 %669
        %671 = vrot.lane.b32.xlu0 %v666, 96
        %v672 = vpop.permute.xlu0 %671
        %vm673 = vcmask 785408
        %v674 = vsel %vm673, %v668, %v670
        %v675 = vsel %vm673, %v670, %v672
        %v678 = vsel %vm177, %v657, %v674
        %v679 = vsel %vm178, %v658, %v675
        %680 = vst [vmem:[#allocation1] ss:$2 sm:$0xff] %v172
        %s681 = scalar_lea.vmem [#allocation1], 16
        %682 = vst [vmem:[%s681] ss:$2 sm:$0xff] %v173
        %v683 = vld.sshfl [vmem:[#allocation1] sm:$0xff pattern:$0x75316420]
        %v684 = vld.sshfl [vmem:[#allocation1 + $0x8] sm:$0xff pattern:$0x75316420]
        %v685 = vld.sshfl [vmem:[#allocation1 + $0x10] sm:$0xff pattern:$0x75316420]
        %686 = vrot.lane.b32.xlu0 %v683, 96
        %v687 = vpop.permute.xlu0 %686
        %688 = vrot.lane.b32.xlu0 %v684, 96
        %v689 = vpop.permute.xlu0 %688
        %690 = vrot.lane.b32.xlu0 %v685, 96
        %v691 = vpop.permute.xlu0 %690
        %v692 = vsel %vm673, %v687, %v689
        %v693 = vsel %vm673, %v689, %v691
        %696 = vst [vmem:[#allocation1] ss:$2 sm:$0xff] %v172
        %s697 = scalar_lea.vmem [#allocation1], 16
        %698 = vst [vmem:[%s697] ss:$2 sm:$0xff] %v173
        %v699 = vld.sshfl [vmem:[#allocation1] sm:$0xff pattern:$0x75316420]
        %v700 = vld.sshfl [vmem:[#allocation1 + $0x8] sm:$0xff pattern:$0x75316420]
        %v701 = vld.sshfl [vmem:[#allocation1 + $0x10] sm:$0xff pattern:$0x75316420]
        %702 = vrot.lane.b32.xlu0 %v699, 94
        %v703 = vpop.permute.xlu0 %702
        %704 = vrot.lane.b32.xlu0 %v700, 94
        %v705 = vpop.permute.xlu0 %704
        %706 = vrot.lane.b32.xlu0 %v701, 94
        %v707 = vpop.permute.xlu0 %706
        %v708 = vsel %vm656, %v703, %v705
        %v709 = vsel %vm656, %v705, %v707
        %v712 = vsel %vm208, %v692, %v708
        %v713 = vsel %vm209, %v693, %v709
        %s714 = scalar_lea.vmem %s1, 48
        %v715 = vld [vmem:[%s714] sm:$0xff]
        %v717 = vsel %vm251, %v715, 0
        %v720 = vsel %vm255, %v678, 0
        %v723 = vsel %vm255, %v679, 0
        %725 = vmatpush.msra.mxu0 0.0
        %726 = vmatpush.msra.mxu0 0.0
        %727 = vmatpush.msra.mxu0 0.0
        %728 = vmatpush.msra.mxu0 0.0
        %729 = vmatpush.msra.mxu0 0.0
        %730 = vmatpush.msra.mxu0 0.0
        %731 = vmatpush.msra.mxu0 0.0
        %732 = vmatpush.msra.mxu0 0.0
        %733 = vmatpush.msra.mxu0 0.0
        %734 = vmatpush.msra.mxu0 0.0
        %735 = vmatpush.msra.mxu0 0.0
        %736 = vmatpush.msra.mxu0 0.0
        %737 = vmatpush.msra.mxu0 0.0
        %738 = vmatpush.msra.mxu0 0.0
        %739 = vmatpush.msra.mxu0 0.0
        %740 = vmatpush.msra.mxu0 %v720
        %741 = vmatmul.f32.gmra.mxu0 %v717
        %v742 = vpop.f32.mrf.mxu0
        %v743 = vadd.f32 0.0, %v742
        %744 = vdwg.mxu0
        %745 = vmatpush.msra.mxu0 0.0
        %746 = vmatpush.msra.mxu0 0.0
        %747 = vmatpush.msra.mxu0 0.0
        %748 = vmatpush.msra.mxu0 0.0
        %749 = vmatpush.msra.mxu0 0.0
        %750 = vmatpush.msra.mxu0 0.0
        %751 = vmatpush.msra.mxu0 0.0
        %752 = vmatpush.msra.mxu0 0.0
        %753 = vmatpush.msra.mxu0 0.0
        %754 = vmatpush.msra.mxu0 0.0
        %755 = vmatpush.msra.mxu0 0.0
        %756 = vmatpush.msra.mxu0 0.0
        %757 = vmatpush.msra.mxu0 0.0
        %758 = vmatpush.msra.mxu0 0.0
        %759 = vmatpush.msra.mxu0 0.0
        %760 = vmatpush.msra.mxu0 %v723
        %761 = vmatmul.f32.gmra.mxu0 %v717
        %v762 = vpop.f32.mrf.mxu0
        %v763 = vadd.f32 0.0, %v762
        %764 = vdwg.mxu0
        %v765 = vadd.f32 %v642, %v743
        %v766 = vadd.f32 %v643, %v763
        %s767 = scalar_lea.vmem %s1, 56
        %v768 = vld [vmem:[%s767] sm:$0xff]
        %769 = vst [vmem:[#allocation1] ss:$2 sm:$0xff] %v172
        %s770 = scalar_lea.vmem [#allocation1], 16
        %771 = vst [vmem:[%s770] ss:$2 sm:$0xff] %v173
        %v772 = vld.sshfl [vmem:[#allocation1] sm:$0xff pattern:$0x75316420]
        %v773 = vld.sshfl [vmem:[#allocation1 + $0x8] sm:$0xff pattern:$0x75316420]
        %v774 = vld.sshfl [vmem:[#allocation1 + $0x10] sm:$0xff pattern:$0x75316420]
        %775 = vrot.lane.b32.xlu0 %v772, 95
        %v776 = vpop.permute.xlu0 %775
        %777 = vrot.lane.b32.xlu0 %v773, 95
        %v778 = vpop.permute.xlu0 %777
        %779 = vrot.lane.b32.xlu0 %v774, 95
        %v780 = vpop.permute.xlu0 %779
        %vm781 = vcmask 777216
        %v782 = vsel %vm781, %v776, %v778
        %v783 = vsel %vm781, %v778, %v780
        %v785 = vsel %vm251, %v768, 0
        %v787 = vsel %vm255, %v782, 0
        %v789 = vsel %vm255, %v783, 0
        %791 = vmatpush.msra.mxu0 0.0
        %792 = vmatpush.msra.mxu0 0.0
        %793 = vmatpush.msra.mxu0 0.0
        %794 = vmatpush.msra.mxu0 0.0
        %795 = vmatpush.msra.mxu0 0.0
        %796 = vmatpush.msra.mxu0 0.0
        %797 = vmatpush.msra.mxu0 0.0
        %798 = vmatpush.msra.mxu0 0.0
        %799 = vmatpush.msra.mxu0 0.0
        %800 = vmatpush.msra.mxu0 0.0
        %801 = vmatpush.msra.mxu0 0.0
        %802 = vmatpush.msra.mxu0 0.0
        %803 = vmatpush.msra.mxu0 0.0
        %804 = vmatpush.msra.mxu0 0.0
        %805 = vmatpush.msra.mxu0 0.0
        %806 = vmatpush.msra.mxu0 %v787
        %807 = vmatmul.f32.gmra.mxu0 %v785
        %v808 = vpop.f32.mrf.mxu0
        %v809 = vadd.f32 0.0, %v808
        %810 = vdwg.mxu0
        %811 = vmatpush.msra.mxu0 0.0
        %812 = vmatpush.msra.mxu0 0.0
        %813 = vmatpush.msra.mxu0 0.0
        %814 = vmatpush.msra.mxu0 0.0
        %815 = vmatpush.msra.mxu0 0.0
        %816 = vmatpush.msra.mxu0 0.0
        %817 = vmatpush.msra.mxu0 0.0
        %818 = vmatpush.msra.mxu0 0.0
        %819 = vmatpush.msra.mxu0 0.0
        %820 = vmatpush.msra.mxu0 0.0
        %821 = vmatpush.msra.mxu0 0.0
        %822 = vmatpush.msra.mxu0 0.0
        %823 = vmatpush.msra.mxu0 0.0
        %824 = vmatpush.msra.mxu0 0.0
        %825 = vmatpush.msra.mxu0 0.0
        %826 = vmatpush.msra.mxu0 %v789
        %827 = vmatmul.f32.gmra.mxu0 %v785
        %v828 = vpop.f32.mrf.mxu0
        %v829 = vadd.f32 0.0, %v828
        %830 = vdwg.mxu0
        %v831 = vadd.f32 %v765, %v809
        %v832 = vadd.f32 %v766, %v829
        %s833 = scalar_lea.vmem %s1, 64
        %v834 = vld [vmem:[%s833] sm:$0xff]
        %v836 = vsel %vm251, %v834, 0
        %v839 = vsel %vm255, %v712, 0
        %v842 = vsel %vm255, %v713, 0
        %844 = vmatpush.msra.mxu0 0.0
        %845 = vmatpush.msra.mxu0 0.0
        %846 = vmatpush.msra.mxu0 0.0
        %847 = vmatpush.msra.mxu0 0.0
        %848 = vmatpush.msra.mxu0 0.0
        %849 = vmatpush.msra.mxu0 0.0
        %850 = vmatpush.msra.mxu0 0.0
        %851 = vmatpush.msra.mxu0 0.0
        %852 = vmatpush.msra.mxu0 0.0
        %853 = vmatpush.msra.mxu0 0.0
        %854 = vmatpush.msra.mxu0 0.0
        %855 = vmatpush.msra.mxu0 0.0
        %856 = vmatpush.msra.mxu0 0.0
        %857 = vmatpush.msra.mxu0 0.0
        %858 = vmatpush.msra.mxu0 0.0
        %859 = vmatpush.msra.mxu0 %v839
        %860 = vmatmul.f32.gmra.mxu0 %v836
        %v861 = vpop.f32.mrf.mxu0
        %v862 = vadd.f32 0.0, %v861
        %863 = vdwg.mxu0
        %864 = vmatpush.msra.mxu0 0.0
        %865 = vmatpush.msra.mxu0 0.0
        %866 = vmatpush.msra.mxu0 0.0
        %867 = vmatpush.msra.mxu0 0.0
        %868 = vmatpush.msra.mxu0 0.0
        %869 = vmatpush.msra.mxu0 0.0
        %870 = vmatpush.msra.mxu0 0.0
        %871 = vmatpush.msra.mxu0 0.0
        %872 = vmatpush.msra.mxu0 0.0
        %873 = vmatpush.msra.mxu0 0.0
        %874 = vmatpush.msra.mxu0 0.0
        %875 = vmatpush.msra.mxu0 0.0
        %876 = vmatpush.msra.mxu0 0.0
        %877 = vmatpush.msra.mxu0 0.0
        %878 = vmatpush.msra.mxu0 0.0
        %879 = vmatpush.msra.mxu0 %v842
        %880 = vmatmul.f32.gmra.mxu0 %v836
        %v881 = vpop.f32.mrf.mxu0
        %v882 = vadd.f32 0.0, %v881
        %883 = vdwg.mxu0
        %v884 = vadd.f32 %v831, %v862
        %v885 = vadd.f32 %v832, %v882
        %v886 = vadd.f32 %v884, %v885
        %887 = vadd.xlane.f32.xlu0 %v886
        %v888 = vpop.xlane.xlu0 %887
        %v889 = vmul.f32 %v888, 0.00390625
        %v890 = vsub.f32 %v884, %v889
        %v891 = vsub.f32 %v885, %v889
        %v892 = vmul.f32 %v890, %v890
        %v893 = vmul.f32 %v891, %v891
        %v894 = vadd.f32 %v892, %v893
        %895 = vadd.xlane.f32.xlu0 %v894
        %v896 = vpop.xlane.xlu0 %895
        %v897 = vmul.f32 %v896, 0.00390625
        %v898 = vadd.f32 %v897, 1e-05
        %v899 = vrsqrt.pop %v898
        %v900 = vmul.f32 %v899, %v898
        %v901 = vmul.f32 %v900, %v899
        %v902 = vmul.f32 0.5, %v901
        %v903 = vsub.f32 1.5, %v902
        %v904 = vmul.f32 %v899, %v903
        %vm905 = vweird.f32 %v898
        %vm906 = vweird.f32 %v899
        %vm907 = vmor %vm905, %vm906
        %v908 = vsel %vm907, %v899, %v904
        %v909 = vmul.f32 %v890, %v908
        %v910 = vmul.f32 %v891, %v908
        %v911 = vmax.f32 %v909, 0.0
        %v912 = vmax.f32 %v910, 0.0
        %913 = vst [vmem:[%s163] sm:$0xff] %v911
        %914 = vst [vmem:[%s163 + $0x8] sm:$0xff] %v912
        %s915 = sand.u32 %s93, 1
        %s916 = scalar_lea.sflag [#allocation3], %s915
        %s917 = sand.u32 %s93, 1
        %s918 = smul.addr %s917, 16
        %s919 = scalar_lea.vmem [#allocation2], %s918
        // Predicated region
        $region33: #{tpu_custom_call.1} parent=31 // pred_check
          %p920 = pneg %p103
        $region34: #{tpu_custom_call.1} parent=31 // pred_check_branch
          %922 = sbr.rel (%p920) target = $region36
        $region35: #{tpu_custom_call.1} parent=31 // pred_region
          %924 = vsyncadd %s916, 0
          %s925 = smul.addr %s17, 2
          %s926 = smul.addr %s925, 8
          %s927 = scalar_lea.hbm %s3, %s926
          %s929 = sshll.u32 %s919, 4
          %s930 = int_to_ptr.vmem [resolvable:$true] %s929
          %s931 = sshll.u32 %s927, 4
          %s932 = int_to_ptr.hbm [resolvable:$true] %s931
          %934 = dma.vmem_to_hbm [thread:$0]  %s930, 256, %s932, %s916
        $region36: #{tpu_custom_call.1} parent=31 // pred_fallthru
          _
      $region32: #{tpu_custom_call.1} parent=5 // pred_fallthru
        _
      %p935 = scmp.le.s32.totalorder 2, %s12
      // Predicated region
      $region37: #{tpu_custom_call.1} parent=5 // pred_check
        %p936 = pneg %p935
      $region38: #{tpu_custom_call.1} parent=5 // pred_check_branch
        %938 = sbr.rel (%p936) target = $region40
      $region39: #{tpu_custom_call.1} parent=5 // pred_region
        %s939 = ssub.s32 %s12, 2
        // Predicated region
        $region41: #{tpu_custom_call.1} parent=39 // pred_check
          %p940 = pneg %p109
        $region42: #{tpu_custom_call.1} parent=39 // pred_check_branch
          %942 = sbr.rel (%p940) target = $region44
        $region43: #{tpu_custom_call.1} parent=39 // pred_region
          %s943 = sand.u32 %s94, 1
          %s944 = scalar_lea.sflag [#allocation3], %s943
          %s945 = sand.u32 %s94, 1
          %s946 = smul.addr %s945, 16
          %s947 = scalar_lea.vmem [#allocation2], %s946
          %949 = dma.done %s944, 256
        $region44: #{tpu_custom_call.1} parent=39 // pred_fallthru
          _
      $region40: #{tpu_custom_call.1} parent=5 // pred_fallthru
        _
    $region6: #{tpu_custom_call.1} parent=1 // loop_footer
      %s16 = sadd.s32 1, %s12
    $region7: #{tpu_custom_call.1} parent=1 // loop_footer_branch
      %11 = sbr.rel target = $region3
    $region8: #{tpu_custom_call.1} parent=1 // loop_exit
      _
    %950 = vsyncpa [#allocation3], 1
    %s951 = scalar_lea.sflag [#allocation3], 1
    %952 = vsyncpa %s951, 1

</llo_original>
